<compile_context>
chip_gen: v7x
topology: tpu7x:2x2x1
jax: 0.10.0
libtpu: 0.0.40
codegen_flags: <defaults>
</compile_context>

<pallas_src>
import jax
import jax.numpy as jnp
import numpy as np
from jax.experimental import pallas as pl
from jax.experimental.pallas import tpu as pltpu


def _round_up(x, m):
    return -(-x // m) * m


# ----------------------------------------------------------------------------
# Graph construction glue (RadiusGraph / ball_query; computed under no_grad in
# the reference implementation -- pure index bookkeeping, kept in plain JAX).
# ----------------------------------------------------------------------------
def ball_query_jax(xyz, new_xyz, radius, k):
    """pointnet2 ball_query: for each query point take the first `k` points (in
    index order) within `radius`; unfilled slots repeat the first neighbor
    (or index 0 when the ball is empty). Returns (indices, validity mask)."""
    n = xyz.shape[1]
    d2 = jnp.sum((new_xyz[:, :, None, :] - xyz[:, None, :, :]) ** 2, axis=-1)   # (bs, m, n)
    within = d2 < (radius ** 2)
    cand = jnp.where(within, jnp.arange(n, dtype=jnp.int32)[None, None, :], jnp.int32(n))
    cand = jnp.sort(cand, axis=-1)[..., :k]                                     # (bs, m, k)
    is_filled = cand < n
    first = jnp.where(is_filled[..., :1], cand[..., :1], 0)                     # first valid (or 0)
    nbr_idx = jnp.where(is_filled, cand, first)
    return nbr_idx.astype(jnp.int32), is_filled


# ----------------------------------------------------------------------------
# Pallas kernels (channels-first, (C, TP) blocks; point tile on the lane axis).
# ----------------------------------------------------------------------------
def edgeconv_matmul_kernel(fi_ref, fj_ref, wd_ref, w2_ref, b_ref, out_ref):
    # fi_ref : (C0, TP)        center features of the current point tile
    # fj_ref : (KC, C0, TP)    KC gathered neighbor slabs of the point tile
    # wd_ref : (C1, C0)        W1 - W2  (acts on fi)
    # w2_ref : (C1, C0)        W2       (acts on fj)
    # b_ref  : (C1, 1)         conv bias
    # out_ref: (C1, TP)        resident max accumulator across the k-chunk axis
    kk = pl.program_id(2)
    w2 = w2_ref[...]
    h = jnp.dot(w2, fj_ref[0], preferred_element_type=jnp.float32)              # (C1, TP)
    for i in range(1, fj_ref.shape[0]):                                         # static KC unroll
        h = jnp.maximum(h, jnp.dot(w2, fj_ref[i], preferred_element_type=jnp.float32))

    @pl.when(kk == 0)
    def _init():
        out_ref[...] = h

    @pl.when(kk > 0)
    def _accumulate():
        out_ref[...] = jnp.maximum(out_ref[...], h)

    @pl.when(kk == pl.num_programs(2) - 1)
    def _finalize():
        base = jnp.dot(wd_ref[...], fi_ref[...], preferred_element_type=jnp.float32)
        out_ref[...] = jnp.maximum(out_ref[...] + base + b_ref[...], 0.0)


def edgeconv_hoisted_kernel(fi_ref, gj_ref, wd_ref, b_ref, out_ref):
    # gj_ref : (KC, C1, TP)    gathered slabs of g = W2 @ feats (matmul hoisted)
    kk = pl.program_id(2)
    h = gj_ref[0]
    for i in range(1, gj_ref.shape[0]):                                         # static KC unroll
        h = jnp.maximum(h, gj_ref[i])
    h = h.astype(jnp.float32)

    @pl.when(kk == 0)
    def _init():
        out_ref[...] = h

    @pl.when(kk > 0)
    def _accumulate():
        out_ref[...] = jnp.maximum(out_ref[...], h)

    @pl.when(kk == pl.num_programs(2) - 1)
    def _finalize():
        base = jnp.dot(wd_ref[...], fi_ref[...], preferred_element_type=jnp.float32)
        out_ref[...] = jnp.maximum(out_ref[...] + base + b_ref[...], 0.0)


# ----------------------------------------------------------------------------
# Per-generation sizing.
# ----------------------------------------------------------------------------
def _vmem_budget():
    """(scoped vmem_limit_bytes, tile-chooser data budget) per TPU generation."""
    try:
        cap = pltpu.get_tpu_info().vmem_capacity_bytes
    except Exception:
        cap = 64 * 1024 * 1024                      # conservative (v7x-sized) fallback
    if cap >= 128 * 1024 * 1024:                    # v5e / v6e: 128 MiB physical VMEM
        return 96 * 1024 * 1024, 64 * 1024 * 1024
    return 48 * 1024 * 1024, 32 * 1024 * 1024       # v7x: 64 MiB per TensorCore


def _choose_tiles(p, c0, c1, k, hoisted, budget_bytes, bs,
                  *, lane_align=256, tp_cap=4096):
    """Pick (point tile TP, neighbor chunk KC).

    VMEM accounting (f32 bytes per point column): fi (c0) and the output
    accumulator (c1) are revisited-resident (single buffer); only the gathered
    neighbor stream (KC * c_stream) is double-buffered by the pipeline.
    """
    c_stream = c1 if hoisted else c0
    kc = min(k, 16)                                  # fold up to 16 neighbors per grid step
    while True:
        per_col = 4 * (c0 + c1 + 2 * kc * c_stream)
        tp = (budget_bytes // per_col) // lane_align * lane_align
        if tp >= lane_align or kc == 1:
            break
        kc = max(1, kc // 2)
    tp = int(max(lane_align, min(tp, tp_cap)))
    p128 = _round_up(p, 128)
    if p128 <= tp:
        tp = p128                                    # whole (128-padded) point axis in one tile
    # v7x has 2 TensorCores/chip: make sure the 'parallel' axes provide >= 2 blocks.
    if bs * (_round_up(p128, tp) // tp) < 2 and p128 > 128:
        tp = _round_up(p128 // 2, 128)
    return tp, kc


# ----------------------------------------------------------------------------
# Forward wrapper.
# ----------------------------------------------------------------------------
def gcn_edge_layer_forward(xyz, feats, weight, bias, *, radius, k,
                           tile_p=None, k_chunk=None, stream_dtype=None):
    """GCNLayer('edge', ...) forward.

    Args:
      xyz:    (bs, p, 3)         float32 point coordinates.
      feats:  (bs, c0, p)        float32 point features (torch layout).
      weight: (c1, 2*c0, 1, 1)   float32 Conv2d weight.
      bias:   (c1,)              float32 Conv2d bias.
      stream_dtype: optional dtype (e.g. jnp.bfloat16) for the gathered
        neighbor stream; default None keeps everything f32 (reference-exact).
    Returns:
      xyz:    (bs, p, 3)   unchanged (scale_factor == 1)
      feats:  (bs, c1, p)  output point features (torch layout).
    """
    bs, c0, p = feats.shape
    c1 = weight.shape[0]

    # --- RadiusGraph (scale_factor = 1): graph construction glue -------------
    nbr_idx, _is_filled = ball_query_jax(xyz, xyz, radius, k)                   # (bs, p, k)

    # --- parameter prep: 1x1 conv -> fused weight factors ---------------------
    w = weight[:, :, 0, 0].astype(jnp.float32)                                  # (c1, 2*c0)
    w2 = w[:, c0:]                                                              # acts on fj
    wdiff = w[:, :c0] - w2                                                      # acts on fi
    b2d = bias.reshape(c1, 1).astype(jnp.float32)

    # --- shape-dependent switch: hoist W2 above the gather iff it shrinks the
    #     k-duplicated neighbor stream (c1 <= c0) -------------------------------
    hoisted = c1 <= c0
    vmem_limit, budget = _vmem_budget()
    tp, kc = _choose_tiles(p, c0, c1, k, hoisted, budget, bs)
    if tile_p is not None:
        tp = int(tile_p)
    if k_chunk is not None:
        kc = int(k_chunk)
    p_pad = _round_up(p, tp)
    k_pad = _round_up(k, kc)

    # --- padding: lane-dense point axis; max-invariant k padding --------------
    feats_p = feats.astype(jnp.float32)
    if p_pad != p:
        feats_p = jnp.pad(feats_p, ((0, 0), (0, 0), (0, p_pad - p)))
        nbr_idx = jnp.pad(nbr_idx, ((0, 0), (0, p_pad - p), (0, 0)))            # idx 0; sliced off
    if k_pad != k:
        nbr_idx = jnp.concatenate(
            [nbr_idx, jnp.repeat(nbr_idx[..., -1:], k_pad - k, axis=-1)], axis=-1)

    # --- neighbor gather (grouping_operation), channels-first ----------------
    src = jnp.einsum('oc,bcp->bop', w2, feats_p) if hoisted else feats_p        # (bs, c*, p_pad)
    idx_t = jnp.transpose(nbr_idx, (0, 2, 1))                                   # (bs, k_pad, p_pad)
    gather1 = lambda f, ix: jnp.take(f, ix, axis=1)                             # (c,p),(p,)->(c,p)
    stream = jax.vmap(jax.vmap(gather1, in_axes=(None, 0)), in_axes=(0, 0))(src, idx_t)
    if stream_dtype is not None:
        stream = stream.astype(stream_dtype)                                    # bf16 streaming option

    c_stream = c1 if hoisted else c0
    n_pt = p_pad // tp
    n_kc = k_pad // kc
    grid = (bs, n_pt, n_kc)

    fi_spec = pl.BlockSpec((pl.Squeezed(), c0, tp), lambda b, j, kk: (b, 0, j))
    st_spec = pl.BlockSpec((pl.Squeezed(), kc, c_stream, tp), lambda b, j, kk: (b, kk, 0, j))
    wd_spec = pl.BlockSpec((c1, c0), lambda b, j, kk: (0, 0))
    b_spec = pl.BlockSpec((c1, 1), lambda b, j, kk: (0, 0))
    o_spec = pl.BlockSpec((pl.Squeezed(), c1, tp), lambda b, j, kk: (b, 0, j))

    common = dict(
        out_shape=jax.ShapeDtypeStruct((bs, c1, p_pad), jnp.float32),
        compiler_params=pltpu.CompilerParams(
            dimension_semantics=("parallel", "parallel", "arbitrary"),
            vmem_limit_bytes=vmem_limit,
        ),
    )

    if hoisted:
        out = pl.pallas_call(
            edgeconv_hoisted_kernel,
            grid_spec=pltpu.PrefetchScalarGridSpec(
                num_scalar_prefetch=0, grid=grid,
                in_specs=[fi_spec, st_spec, wd_spec, b_spec],
                out_specs=o_spec),
            **common,
        )(feats_p, stream, wdiff, b2d)
    else:
        w2_spec = pl.BlockSpec((c1, c0), lambda b, j, kk: (0, 0))
        w2_k = w2 if stream_dtype is None else w2.astype(stream_dtype)
        out = pl.pallas_call(
            edgeconv_matmul_kernel,
            grid_spec=pltpu.PrefetchScalarGridSpec(
                num_scalar_prefetch=0, grid=grid,
                in_specs=[fi_spec, st_spec, wd_spec, w2_spec, b_spec],
                out_specs=o_spec),
            **common,
        )(feats_p, stream, wdiff, w2_k, b2d)

    if p_pad != p:
        out = out[:, :, :p]
    return xyz, out                                                             # (bs, c1, p)


# ----------------------------------------------------------------------------
# Pure-JAX reference (mirrors the torch EdgeConv forward) for verification.
# ----------------------------------------------------------------------------
def reference_forward(xyz, feats, weight, bias, *, radius, k):
    nbr_idx, _ = ball_query_jax(xyz, xyz, radius, k)
    fj = jax.vmap(lambda f, ix: f[:, ix])(feats, nbr_idx)                       # (bs, c0, p, k)
    fi = jnp.broadcast_to(feats[..., None], fj.shape)                           # (bs, c0, p, k)
    x = jnp.concatenate([fi, fj - fi], axis=1)                                  # (bs, 2c0, p, k)
    w = weight[:, :, 0, 0]                                                      # (c1, 2c0)
    f = jnp.einsum('oc,bcpk->bopk', w, x) + bias[None, :, None, None]
    out = jnp.maximum(jnp.max(f, axis=-1), 0.0)                                 # (bs, c1, p)
    return xyz, out


if __name__ == "__main__":
    key = jax.random.PRNGKey(0)
    k1, k2, k3, k4, k5, k6, k7, k8 = jax.random.split(key, 8)
    radius = 0.4

    # --- Case 1: c1 > c0 -> in-kernel W2-matmul path.  Exercises point/k
    #     padding, two point tiles and two folded k-chunks (grid = (2, 2, 2)).
    bs, p, c0, c1, knn = 2, 200, 8, 16, 6
    xyz = jax.random.uniform(k1, (bs, p, 3), dtype=jnp.float32)
    feats = jax.random.normal(k2, (bs, c0, p), dtype=jnp.float32)
    weight = 0.1 * jax.random.normal(k3, (c1, 2 * c0, 1, 1), dtype=jnp.float32)
    bias = 0.1 * jax.random.normal(k4, (c1,), dtype=jnp.float32)

    xyz_out, feats_out = gcn_edge_layer_forward(
        xyz, feats, weight, bias, radius=radius, k=knn, tile_p=128, k_chunk=4)
    jax.block_until_ready(feats_out)
    _, ref_out = reference_forward(xyz, feats, weight, bias, radius=radius, k=knn)
    np.testing.assert_allclose(np.asarray(feats_out), np.asarray(ref_out), rtol=1e-5, atol=1e-5)
    assert feats_out.shape == (bs, c1, p)
    assert xyz_out.shape == (bs, p, 3)

    # --- Case 2: c1 <= c0 -> W2 matmul hoisted above the gather; automatic
    #     tile/chunk selection (bs == 1 triggers the 2-parallel-block split).
    bs, p, c0, c1, knn = 1, 256, 16, 8, 8
    xyz2 = jax.random.uniform(k5, (bs, p, 3), dtype=jnp.float32)
    feats2 = jax.random.normal(k6, (bs, c0, p), dtype=jnp.float32)
    weight2 = 0.1 * jax.random.normal(k7, (c1, 2 * c0, 1, 1), dtype=jnp.float32)
    bias2 = 0.1 * jax.random.normal(k8, (c1,), dtype=jnp.float32)

    xyz2_out, feats2_out = gcn_edge_layer_forward(
        xyz2, feats2, weight2, bias2, radius=radius, k=knn)
    jax.block_until_ready(feats2_out)
    _, ref2_out = reference_forward(xyz2, feats2, weight2, bias2, radius=radius, k=knn)
    np.testing.assert_allclose(np.asarray(feats2_out), np.asarray(ref2_out), rtol=1e-5, atol=1e-5)
    assert feats2_out.shape == (bs, c1, p)

    print("KERNEL_OK")
</pallas_src>

<mosaic_0001>
module attributes {stable_mosaic.version = 11 : i64} {
  func.func @edgeconv_matmul_kernel(%arg0: i32, %arg1: i32, %arg2: i32, %arg3: memref<1x8x128xf32, #tpu.memory_space<vmem>>, %arg4: memref<1x4x8x128xf32, #tpu.memory_space<vmem>>, %arg5: memref<16x8xf32, #tpu.memory_space<vmem>>, %arg6: memref<16x8xf32, #tpu.memory_space<vmem>>, %arg7: memref<16x1xf32, #tpu.memory_space<vmem>>, %arg8: memref<1x16x128xf32, #tpu.memory_space<vmem>>) attributes {dimension_semantics = [#tpu.dimension_semantics<parallel>, #tpu.dimension_semantics<parallel>, #tpu.dimension_semantics<arbitrary>], iteration_bounds = array<i64: 2, 2, 2>, scalar_prefetch = 0 : i64, scratch_operands = 0 : i64, tpu.core_type = #tpu.core_type<tc>, window_params = [{transform_indices = @transform_0, window_bounds = array<i64: 1, 8, 128>}, {transform_indices = @transform_1, window_bounds = array<i64: 1, 4, 8, 128>}, {pipeline_mode = #tpu.pipeline_mode<synchronous>, transform_indices = @transform_2, window_bounds = array<i64: 16, 8>}, {pipeline_mode = #tpu.pipeline_mode<synchronous>, transform_indices = @transform_3, window_bounds = array<i64: 16, 8>}, {pipeline_mode = #tpu.pipeline_mode<synchronous>, transform_indices = @transform_4, window_bounds = array<i64: 16, 1>}, {transform_indices = @transform_5, window_bounds = array<i64: 1, 16, 128>}]} {
    %c0 = arith.constant 0 : index
    %c0_0 = arith.constant 0 : index
    %0 = vector.load %arg6[%c0, %c0_0] : memref<16x8xf32, #tpu.memory_space<vmem>>, vector<16x8xf32>
    %c0_1 = arith.constant 0 : index
    %c0_2 = arith.constant 0 : index
    %c0_3 = arith.constant 0 : index
    %c0_4 = arith.constant 0 : index
    %1 = vector.load %arg4[%c0_1, %c0_2, %c0_3, %c0_4] : memref<1x4x8x128xf32, #tpu.memory_space<vmem>>, vector<1x1x8x128xf32>
    %2 = vector.shape_cast %1 : vector<1x1x8x128xf32> to vector<8x128xf32>
    %cst = arith.constant dense<0.000000e+00> : vector<16x128xf32>
    %3 = tpu.matmul %0, %2, %cst {dimension_numbers = #tpu.dot_dimension_numbers<[1], [0], [0], [1], [0, 0, 1, 1], [], []>} : vector<16x8xf32>, vector<8x128xf32>, vector<16x128xf32> -> vector<16x128xf32>
    %c0_5 = arith.constant 0 : index
    %c1 = arith.constant 1 : index
    %c0_6 = arith.constant 0 : index
    %c0_7 = arith.constant 0 : index
    %4 = vector.load %arg4[%c0_5, %c1, %c0_6, %c0_7] : memref<1x4x8x128xf32, #tpu.memory_space<vmem>>, vector<1x1x8x128xf32>
    %5 = vector.shape_cast %4 : vector<1x1x8x128xf32> to vector<8x128xf32>
    %cst_8 = arith.constant dense<0.000000e+00> : vector<16x128xf32>
    %6 = tpu.matmul %0, %5, %cst_8 {dimension_numbers = #tpu.dot_dimension_numbers<[1], [0], [0], [1], [0, 0, 1, 1], [], []>} : vector<16x8xf32>, vector<8x128xf32>, vector<16x128xf32> -> vector<16x128xf32>
    %7 = arith.maximumf %3, %6 : vector<16x128xf32>
    %c0_9 = arith.constant 0 : index
    %c2 = arith.constant 2 : index
    %c0_10 = arith.constant 0 : index
    %c0_11 = arith.constant 0 : index
    %8 = vector.load %arg4[%c0_9, %c2, %c0_10, %c0_11] : memref<1x4x8x128xf32, #tpu.memory_space<vmem>>, vector<1x1x8x128xf32>
    %9 = vector.shape_cast %8 : vector<1x1x8x128xf32> to vector<8x128xf32>
    %cst_12 = arith.constant dense<0.000000e+00> : vector<16x128xf32>
    %10 = tpu.matmul %0, %9, %cst_12 {dimension_numbers = #tpu.dot_dimension_numbers<[1], [0], [0], [1], [0, 0, 1, 1], [], []>} : vector<16x8xf32>, vector<8x128xf32>, vector<16x128xf32> -> vector<16x128xf32>
    %11 = arith.maximumf %7, %10 : vector<16x128xf32>
    %c0_13 = arith.constant 0 : index
    %c3 = arith.constant 3 : index
    %c0_14 = arith.constant 0 : index
    %c0_15 = arith.constant 0 : index
    %12 = vector.load %arg4[%c0_13, %c3, %c0_14, %c0_15] : memref<1x4x8x128xf32, #tpu.memory_space<vmem>>, vector<1x1x8x128xf32>
    %13 = vector.shape_cast %12 : vector<1x1x8x128xf32> to vector<8x128xf32>
    %cst_16 = arith.constant dense<0.000000e+00> : vector<16x128xf32>
    %14 = tpu.matmul %0, %13, %cst_16 {dimension_numbers = #tpu.dot_dimension_numbers<[1], [0], [0], [1], [0, 0, 1, 1], [], []>} : vector<16x8xf32>, vector<8x128xf32>, vector<16x128xf32> -> vector<16x128xf32>
    %15 = arith.maximumf %11, %14 : vector<16x128xf32>
    %c0_i32 = arith.constant 0 : i32
    %16 = arith.cmpi eq, %arg2, %c0_i32 : i32
    %17 = arith.extui %16 : i1 to i32
    %c0_i32_17 = arith.constant 0 : i32
    %18 = arith.cmpi ne, %17, %c0_i32_17 : i32
    scf.if %18 {
      %c0_21 = arith.constant 0 : index
      %c0_22 = arith.constant 0 : index
      %c0_23 = arith.constant 0 : index
      %25 = vector.load %arg8[%c0_21, %c0_22, %c0_23] : memref<1x16x128xf32, #tpu.memory_space<vmem>>, vector<1x16x128xf32>
      %26 = vector.shape_cast %25 : vector<1x16x128xf32> to vector<16x128xf32>
      %27 = vector.shape_cast %15 : vector<16x128xf32> to vector<1x16x128xf32>
      tpu.vector_store %arg8[%c0_21, %c0_22, %c0_23], %27 {strides = array<i32>} : memref<1x16x128xf32, #tpu.memory_space<vmem>>, vector<1x16x128xf32>,
    } else {
    }
    %c0_i32_18 = arith.constant 0 : i32
    %19 = arith.cmpi sgt, %arg2, %c0_i32_18 : i32
    %20 = arith.extui %19 : i1 to i32
    %c0_i32_19 = arith.constant 0 : i32
    %21 = arith.cmpi ne, %20, %c0_i32_19 : i32
    scf.if %21 {
      %c0_21 = arith.constant 0 : index
      %c0_22 = arith.constant 0 : index
      %c0_23 = arith.constant 0 : index
      %25 = vector.load %arg8[%c0_21, %c0_22, %c0_23] : memref<1x16x128xf32, #tpu.memory_space<vmem>>, vector<1x16x128xf32>
      %26 = vector.shape_cast %25 : vector<1x16x128xf32> to vector<16x128xf32>
      %27 = arith.maximumf %26, %15 : vector<16x128xf32>
      %c0_24 = arith.constant 0 : index
      %c0_25 = arith.constant 0 : index
      %c0_26 = arith.constant 0 : index
      %28 = vector.load %arg8[%c0_24, %c0_25, %c0_26] : memref<1x16x128xf32, #tpu.memory_space<vmem>>, vector<1x16x128xf32>
      %29 = vector.shape_cast %28 : vector<1x16x128xf32> to vector<16x128xf32>
      %30 = vector.shape_cast %27 : vector<16x128xf32> to vector<1x16x128xf32>
      tpu.vector_store %arg8[%c0_24, %c0_25, %c0_26], %30 {strides = array<i32>} : memref<1x16x128xf32, #tpu.memory_space<vmem>>, vector<1x16x128xf32>,
    } else {
    }
    %c1_i32 = arith.constant 1 : i32
    %22 = arith.cmpi eq, %arg2, %c1_i32 : i32
    %23 = arith.extui %22 : i1 to i32
    %c0_i32_20 = arith.constant 0 : i32
    %24 = arith.cmpi ne, %23, %c0_i32_20 : i32
    scf.if %24 {
      %c0_21 = arith.constant 0 : index
      %c0_22 = arith.constant 0 : index
      %25 = vector.load %arg5[%c0_21, %c0_22] : memref<16x8xf32, #tpu.memory_space<vmem>>, vector<16x8xf32>
      %c0_23 = arith.constant 0 : index
      %c0_24 = arith.constant 0 : index
      %c0_25 = arith.constant 0 : index
      %26 = vector.load %arg3[%c0_23, %c0_24, %c0_25] : memref<1x8x128xf32, #tpu.memory_space<vmem>>, vector<1x8x128xf32>
      %27 = vector.shape_cast %26 : vector<1x8x128xf32> to vector<8x128xf32>
      %cst_26 = arith.constant dense<0.000000e+00> : vector<16x128xf32>
      %28 = tpu.matmul %25, %27, %cst_26 {dimension_numbers = #tpu.dot_dimension_numbers<[1], [0], [0], [1], [0, 0, 1, 1], [], []>} : vector<16x8xf32>, vector<8x128xf32>, vector<16x128xf32> -> vector<16x128xf32>
      %c0_27 = arith.constant 0 : index
      %c0_28 = arith.constant 0 : index
      %c0_29 = arith.constant 0 : index
      %29 = vector.load %arg8[%c0_27, %c0_28, %c0_29] : memref<1x16x128xf32, #tpu.memory_space<vmem>>, vector<1x16x128xf32>
      %30 = vector.shape_cast %29 : vector<1x16x128xf32> to vector<16x128xf32>
      %31 = arith.addf %30, %28 : vector<16x128xf32>
      %c0_30 = arith.constant 0 : index
      %c0_31 = arith.constant 0 : index
      %32 = vector.load %arg7[%c0_30, %c0_31] : memref<16x1xf32, #tpu.memory_space<vmem>>, vector<16x1xf32>
      %33 = vector.broadcast %32 : vector<16x1xf32> to vector<16x128xf32>
      %34 = arith.addf %31, %33 : vector<16x128xf32>
      %cst_32 = arith.constant 0.000000e+00 : f32
      %35 = vector.broadcast %cst_32 : f32 to vector<16x128xf32>
      %36 = arith.maximumf %34, %35 : vector<16x128xf32>
      %c0_33 = arith.constant 0 : index
      %c0_34 = arith.constant 0 : index
      %c0_35 = arith.constant 0 : index
      %37 = vector.load %arg8[%c0_33, %c0_34, %c0_35] : memref<1x16x128xf32, #tpu.memory_space<vmem>>, vector<1x16x128xf32>
      %38 = vector.shape_cast %37 : vector<1x16x128xf32> to vector<16x128xf32>
      %39 = vector.shape_cast %36 : vector<16x128xf32> to vector<1x16x128xf32>
      tpu.vector_store %arg8[%c0_33, %c0_34, %c0_35], %39 {strides = array<i32>} : memref<1x16x128xf32, #tpu.memory_space<vmem>>, vector<1x16x128xf32>,
    } else {
    }
    return
  }
  func.func @transform_0(%arg0: i32, %arg1: i32, %arg2: i32) -> (i32, i32, i32) {
    %c0_i32 = arith.constant 0 : i32
    %c0_i32_0 = arith.constant 0 : i32
    return %arg0, %c0_i32, %arg1 : i32, i32, i32
  }
  func.func @transform_1(%arg0: i32, %arg1: i32, %arg2: i32) -> (i32, i32, i32, i32) {
    %c0_i32 = arith.constant 0 : i32
    %c0_i32_0 = arith.constant 0 : i32
    return %arg0, %arg2, %c0_i32, %arg1 : i32, i32, i32, i32
  }
  func.func @transform_2(%arg0: i32, %arg1: i32, %arg2: i32) -> (i32, i32) {
    %c0_i32 = arith.constant 0 : i32
    %c0_i32_0 = arith.constant 0 : i32
    %c0_i32_1 = arith.constant 0 : i32
    return %c0_i32, %c0_i32_0 : i32, i32
  }
  func.func @transform_3(%arg0: i32, %arg1: i32, %arg2: i32) -> (i32, i32) {
    %c0_i32 = arith.constant 0 : i32
    %c0_i32_0 = arith.constant 0 : i32
    %c0_i32_1 = arith.constant 0 : i32
    return %c0_i32, %c0_i32_0 : i32, i32
  }
  func.func @transform_4(%arg0: i32, %arg1: i32, %arg2: i32) -> (i32, i32) {
    %c0_i32 = arith.constant 0 : i32
    %c0_i32_0 = arith.constant 0 : i32
    %c0_i32_1 = arith.constant 0 : i32
    return %c0_i32, %c0_i32_0 : i32, i32
  }
  func.func @transform_5(%arg0: i32, %arg1: i32, %arg2: i32) -> (i32, i32, i32) {
    %c0_i32 = arith.constant 0 : i32
    %c0_i32_0 = arith.constant 0 : i32
    return %arg0, %c0_i32, %arg1 : i32, i32, i32
  }
}

</mosaic_0001>

<llo_original>
// kernel: tpu_custom_call.1
$region0: #{tpu_custom_call.1}
  #allocation0 [shape = 'u32[]', space=smem, size = 0x4, offset = 0x4, fixed_abs, tag = 'smem constant byte address 0x4 - core index']
  #allocation1 [shape = 'u32[144,128]{1,0:T(1,128)}', space=vmem, size = 0x12000, scoped, tag = 'internal scratch']
  %s0 = inlined_call_operand.vmem [shape: f32[2,8,256], index: 0, kind: input, shape index: {}]
  %s1 = inlined_call_operand.hbm [shape: f32[2,8,8,256], index: 1, kind: input, shape index: {}]
  %s2 = inlined_call_operand.vmem [shape: f32[16,8], index: 2, kind: input, shape index: {}]
  %s3 = inlined_call_operand.vmem [shape: f32[16,8], index: 3, kind: input, shape index: {}]
  %s4 = inlined_call_operand.vmem [shape: f32[16,1], index: 4, kind: input, shape index: {}]
  %s5 = inlined_call_operand.hbm [shape: f32[2,16,256], index: 5, kind: output, shape index: {}]
  %s6 = sld [smem:[#allocation0]]
  $region69: #{tpu_custom_call.1} parent=0
    _
  %s8 = ssub.s32 1, %s6
  %s9 = scalar_select 0, %s8, %s6
  $region1: #{tpu_custom_call.1} parent=0
    #allocation2 [shape = 'u8[32768]{0}', space=vmem, size = 0x8000, scoped, tag = 'input window, operand 1']
    #allocation3 [shape = 's32[2]{0}', space=sflag, size = 0x8, scoped, tag = 'scoped memory for tpu_custom_call.1']
    #allocation4 [shape = 's32[2]{0}', space=sflag, size = 0x8, scoped, tag = 'scoped memory for tpu_custom_call.1']
    #allocation5 [shape = 'u8[16384]{0}', space=vmem, size = 0x4000, scoped, tag = 'output window, operand 0']
    %10 = vsyncpa [#allocation3], 0
    %s11 = scalar_lea.sflag [#allocation3], 1
    %12 = vsyncpa %s11, 0
    %13 = vsyncpa [#allocation4], 0
    %s14 = scalar_lea.sflag [#allocation4], 1
    %15 = vsyncpa %s14, 0
    loop: start=0, step=1, limit=10
    $region2: #{tpu_custom_call.1} parent=1 // loop_pre_header
      _
    $region3: #{tpu_custom_call.1} parent=1 // loop_header
      %s17 = sphi 0, %s21
      %p18 = scmp.ge.s32.totalorder %s17, 10
      %s24 = sphi 0, %s43
      %s25 = sphi 0, %s39
      %s26 = sphi 0, %s35
      %s27 = sphi 0, %s24
      %s28 = sphi 0, %s25
      %s29 = sphi 0, %s26
      %s30 = sphi 0, %s27
      %s31 = sphi 0, %s28
      %s32 = sphi 0, %s29
      %s48 = sphi 0, %s50
      %s51 = sphi 0, %s48
      %s52 = sphi 0, %s51
      %s68 = sphi 0, %s52
      %s78 = sphi 0, %s80
      %s81 = sphi 0, %s78
      %s82 = sphi 0, %s81
      %s98 = sphi 0, %s82
      %s102 = sphi 0, %s102
      %s104 = sphi 0, %s102
      %s105 = sphi 0, %s104
      %s119 = sphi 0, %s105
      %s123 = sphi 0, %s123
      %s125 = sphi 0, %s123
      %s126 = sphi 0, %s125
      %s140 = sphi 0, %s126
      %s144 = sphi 0, %s144
      %s146 = sphi 0, %s144
      %s147 = sphi 0, %s146
      %s161 = sphi 0, %s147
      %s169 = sphi 0, %s171
      %s172 = sphi 0, %s169
      %s173 = sphi 0, %s172
      %s189 = sphi 0, %s173
    $region4: #{tpu_custom_call.1} parent=1 // loop_header_branch
      %20 = sbr.rel (%p18) target = $region8
    $region5: #{tpu_custom_call.1} parent=1 // loop_body
      %s22 = ssub.s32 %s17, 1
      %s23 = ssub.s32 %s17, 2
      %s33 = sadd.s32 1, %s26
      %p34 = scmp.ge.s32.totalorder %s33, 2
      %s35 = scalar_select %p34, 0, %s33
      %s36 = sadd.s32 1, %s25
      %s37 = scalar_select %p34, %s36, %s25
      %p38 = scmp.ge.s32.totalorder %s37, 2
      %s39 = scalar_select %p38, 0, %s37
      %s40 = sadd.s32 1, %s24
      %s41 = scalar_select %p38, %s40, %s24
      %p42 = scmp.ge.s32.totalorder %s41, 2
      %s43 = scalar_select %p42, 0, %s41
      %s44 = ssub.s32 %s24, %s43
      %s45 = ssub.s32 %s25, %s39
      %s46 = sor.u32 %s44, %s45
      %p47 = scmp.eq.s32.totalorder %s46, 0
      %s49 = sadd.s32 %s48, 1
      %s50 = scalar_select %p47, %s48, %s49
      %p53 = pneg %p47
      %p54 = scmp.eq.s32.totalorder %s17, 7
      %p55 = por %p53, %p54
      %p56 = scmp.ne.s32.totalorder %s48, %s51
      %p57 = scmp.eq.s32.totalorder %s17, 0
      %p58 = por %p56, %p57
      %p59 = scmp.ne.s32.totalorder %s48, %s51
      %p60 = scmp.eq.s32.totalorder %s22, 7
      %p61 = por %p59, %p60
      %p62 = scmp.ne.s32.totalorder %s51, %s52
      %p63 = scmp.eq.s32.totalorder %s22, 0
      %p64 = por %p62, %p63
      %p65 = scmp.ne.s32.totalorder %s51, %s52
      %p66 = scmp.eq.s32.totalorder %s23, 7
      %p67 = por %p65, %p66
      %p69 = scmp.ne.s32.totalorder %s52, %s68
      %p70 = scmp.eq.s32.totalorder %s23, 0
      %p71 = por %p69, %p70
      %s72 = ssub.s32 %s24, %s43
      %s73 = ssub.s32 %s26, %s35
      %s74 = sor.u32 %s72, %s73
      %s75 = ssub.s32 %s25, %s39
      %s76 = sor.u32 %s74, %s75
      %p77 = scmp.eq.s32.totalorder %s76, 0
      %s79 = sadd.s32 %s78, 1
      %s80 = scalar_select %p77, %s78, %s79
      %p83 = pneg %p77
      %p84 = scmp.eq.s32.totalorder %s17, 7
      %p85 = por %p83, %p84
      %p86 = scmp.ne.s32.totalorder %s78, %s81
      %p87 = scmp.eq.s32.totalorder %s17, 0
      %p88 = por %p86, %p87
      %p89 = scmp.ne.s32.totalorder %s78, %s81
      %p90 = scmp.eq.s32.totalorder %s22, 7
      %p91 = por %p89, %p90
      %p92 = scmp.ne.s32.totalorder %s81, %s82
      %p93 = scmp.eq.s32.totalorder %s22, 0
      %p94 = por %p92, %p93
      %p95 = scmp.ne.s32.totalorder %s81, %s82
      %p96 = scmp.eq.s32.totalorder %s23, 7
      %p97 = por %p95, %p96
      %p99 = scmp.ne.s32.totalorder %s82, %s98
      %p100 = scmp.eq.s32.totalorder %s23, 0
      %p101 = por %p99, %p100
      %s103 = sadd.s32 %s102, 1
      %p106 = scmp.eq.s32.totalorder %s17, 7
      %p107 = scmp.ne.s32.totalorder %s102, %s104
      %p108 = scmp.eq.s32.totalorder %s17, 0
      %p109 = por %p107, %p108
      %p110 = scmp.ne.s32.totalorder %s102, %s104
      %p111 = scmp.eq.s32.totalorder %s22, 7
      %p112 = por %p110, %p111
      %p113 = scmp.ne.s32.totalorder %s104, %s105
      %p114 = scmp.eq.s32.totalorder %s22, 0
      %p115 = por %p113, %p114
      %p116 = scmp.ne.s32.totalorder %s104, %s105
      %p117 = scmp.eq.s32.totalorder %s23, 7
      %p118 = por %p116, %p117
      %p120 = scmp.ne.s32.totalorder %s105, %s119
      %p121 = scmp.eq.s32.totalorder %s23, 0
      %p122 = por %p120, %p121
      %s124 = sadd.s32 %s123, 1
      %p127 = scmp.eq.s32.totalorder %s17, 7
      %p128 = scmp.ne.s32.totalorder %s123, %s125
      %p129 = scmp.eq.s32.totalorder %s17, 0
      %p130 = por %p128, %p129
      %p131 = scmp.ne.s32.totalorder %s123, %s125
      %p132 = scmp.eq.s32.totalorder %s22, 7
      %p133 = por %p131, %p132
      %p134 = scmp.ne.s32.totalorder %s125, %s126
      %p135 = scmp.eq.s32.totalorder %s22, 0
      %p136 = por %p134, %p135
      %p137 = scmp.ne.s32.totalorder %s125, %s126
      %p138 = scmp.eq.s32.totalorder %s23, 7
      %p139 = por %p137, %p138
      %p141 = scmp.ne.s32.totalorder %s126, %s140
      %p142 = scmp.eq.s32.totalorder %s23, 0
      %p143 = por %p141, %p142
      %s145 = sadd.s32 %s144, 1
      %p148 = scmp.eq.s32.totalorder %s17, 7
      %p149 = scmp.ne.s32.totalorder %s144, %s146
      %p150 = scmp.eq.s32.totalorder %s17, 0
      %p151 = por %p149, %p150
      %p152 = scmp.ne.s32.totalorder %s144, %s146
      %p153 = scmp.eq.s32.totalorder %s22, 7
      %p154 = por %p152, %p153
      %p155 = scmp.ne.s32.totalorder %s146, %s147
      %p156 = scmp.eq.s32.totalorder %s22, 0
      %p157 = por %p155, %p156
      %p158 = scmp.ne.s32.totalorder %s146, %s147
      %p159 = scmp.eq.s32.totalorder %s23, 7
      %p160 = por %p158, %p159
      %p162 = scmp.ne.s32.totalorder %s147, %s161
      %p163 = scmp.eq.s32.totalorder %s23, 0
      %p164 = por %p162, %p163
      %s165 = ssub.s32 %s24, %s43
      %s166 = ssub.s32 %s25, %s39
      %s167 = sor.u32 %s165, %s166
      %p168 = scmp.eq.s32.totalorder %s167, 0
      %s170 = sadd.s32 %s169, 1
      %s171 = scalar_select %p168, %s169, %s170
      %p174 = pneg %p168
      %p175 = scmp.eq.s32.totalorder %s17, 7
      %p176 = por %p174, %p175
      %p177 = scmp.ne.s32.totalorder %s169, %s172
      %p178 = scmp.eq.s32.totalorder %s17, 0
      %p179 = por %p177, %p178
      %p180 = scmp.ne.s32.totalorder %s169, %s172
      %p181 = scmp.eq.s32.totalorder %s22, 7
      %p182 = por %p180, %p181
      %p183 = scmp.ne.s32.totalorder %s172, %s173
      %p184 = scmp.eq.s32.totalorder %s22, 0
      %p185 = por %p183, %p184
      %p186 = scmp.ne.s32.totalorder %s172, %s173
      %p187 = scmp.eq.s32.totalorder %s23, 7
      %p188 = por %p186, %p187
      %p190 = scmp.ne.s32.totalorder %s173, %s189
      %p191 = scmp.eq.s32.totalorder %s23, 0
      %p192 = por %p190, %p191
      %p193 = scmp.le.s32.totalorder 1, %s17
      %p194 = scmp.lt.s32.totalorder %s17, 9
      %p195 = pnand %p193, %p194
      %p196 = pneg %p195
      // Predicated region
      $region9: #{tpu_custom_call.1} parent=5 // pred_check
        _
      $region10: #{tpu_custom_call.1} parent=5 // pred_check_branch
        %198 = sbr.rel (%p195) target = $region12
      $region11: #{tpu_custom_call.1} parent=5 // pred_region
        %s199 = ssub.s32 %s17, 1
        // Predicated region
        $region13: #{tpu_custom_call.1} parent=11 // pred_check
          %p200 = pneg %p115
        $region14: #{tpu_custom_call.1} parent=11 // pred_check_branch
          %202 = sbr.rel (%p200) target = $region16
        $region15: #{tpu_custom_call.1} parent=11 // pred_region
          _
        $region16: #{tpu_custom_call.1} parent=11 // pred_fallthru
          _
        // Predicated region
        $region17: #{tpu_custom_call.1} parent=11 // pred_check
          %p203 = pneg %p136
        $region18: #{tpu_custom_call.1} parent=11 // pred_check_branch
          %205 = sbr.rel (%p203) target = $region20
        $region19: #{tpu_custom_call.1} parent=11 // pred_region
          _
        $region20: #{tpu_custom_call.1} parent=11 // pred_fallthru
          _
        // Predicated region
        $region21: #{tpu_custom_call.1} parent=11 // pred_check
          %p206 = pneg %p157
        $region22: #{tpu_custom_call.1} parent=11 // pred_check_branch
          %208 = sbr.rel (%p206) target = $region24
        $region23: #{tpu_custom_call.1} parent=11 // pred_region
          _
        $region24: #{tpu_custom_call.1} parent=11 // pred_fallthru
          _
      $region12: #{tpu_custom_call.1} parent=5 // pred_fallthru
        _
      %p209 = scmp.lt.s32.totalorder %s17, 8
      // Predicated region
      $region25: #{tpu_custom_call.1} parent=5 // pred_check
        %p210 = pneg %p209
      $region26: #{tpu_custom_call.1} parent=5 // pred_check_branch
        %212 = sbr.rel (%p210) target = $region28
      $region27: #{tpu_custom_call.1} parent=5 // pred_region
        // Predicated region
        $region29: #{tpu_custom_call.1} parent=27 // pred_check
          %p213 = pneg %p58
        $region30: #{tpu_custom_call.1} parent=27 // pred_check_branch
          %215 = sbr.rel (%p213) target = $region32
        $region31: #{tpu_custom_call.1} parent=27 // pred_region
          %p216 = scmp.lt.s32.totalorder %s24, 1
          %s217 = scalar_select %p216, %s24, 1
          %p218 = scmp.lt.s32.totalorder %s25, 1
          %s219 = scalar_select %p218, %s25, 1
          %s220 = smul.addr %s217, 2
          %s221 = sadd.s32 %s219, %s220
          %s222 = smul.addr %s221, 8
          %s223 = scalar_lea.vmem %s0, %s222
        $region32: #{tpu_custom_call.1} parent=27 // pred_fallthru
          _
        // Predicated region
        $region33: #{tpu_custom_call.1} parent=27 // pred_check
          %p224 = pneg %p88
        $region34: #{tpu_custom_call.1} parent=27 // pred_check_branch
          %226 = sbr.rel (%p224) target = $region36
        $region35: #{tpu_custom_call.1} parent=27 // pred_region
          %s227 = sand.u32 %s78, 1
          %s228 = scalar_lea.sflag [#allocation3], %s227
          %s229 = sand.u32 %s78, 1
          %s230 = smul.addr %s229, 32
          %s231 = scalar_lea.vmem [#allocation2], %s230
          %s232 = smul.u32 4, %s26
          %s234 = ssub.s32 512, 512
          %235 = vsyncadd %s228, %s234
          %s236 = smul.addr %s232, 2
          %s237 = sadd.s32 %s25, %s236
          %s238 = smul.addr %s24, 16
          %s239 = sadd.s32 %s237, %s238
          %s240 = smul.addr %s239, 128
          %s241 = scalar_lea.hbm %s1, %s240
          %s242 = sshll.u32 %s231, 4
          %s243 = int_to_ptr.vmem [resolvable:$true] %s242
          %248 = dma.hbm_to_vmem [thread:$0]  %s241, 512, %s243, %s228, 256, 128, 8
        $region36: #{tpu_custom_call.1} parent=27 // pred_fallthru
          _
      $region28: #{tpu_custom_call.1} parent=5 // pred_fallthru
        _
      %p249 = scmp.le.s32.totalorder 1, %s17
      %p250 = scmp.lt.s32.totalorder %s17, 9
      %p251 = pnand %p249, %p250
      %p252 = pneg %p251
      // Predicated region
      $region37: #{tpu_custom_call.1} parent=5 // pred_check
        _
      $region38: #{tpu_custom_call.1} parent=5 // pred_check_branch
        %254 = sbr.rel (%p251) target = $region40
      $region39: #{tpu_custom_call.1} parent=5 // pred_region
        %s255 = ssub.s32 %s17, 1
        %s256 = sand.u32 %s81, 1
        %s257 = scalar_lea.sflag [#allocation3], %s256
        %s258 = sand.u32 %s81, 1
        %s259 = smul.addr %s258, 32
        %s260 = scalar_lea.vmem [#allocation2], %s259
        // Predicated region
        $region41: #{tpu_custom_call.1} parent=39 // pred_check
          %p261 = pneg %p94
        $region42: #{tpu_custom_call.1} parent=39 // pred_check_branch
          %263 = sbr.rel (%p261) target = $region44
        $region43: #{tpu_custom_call.1} parent=39 // pred_region
          %264 = dma.done %s257, 512
        $region44: #{tpu_custom_call.1} parent=39 // pred_fallthru
          _
        %p265 = scmp.lt.s32.totalorder %s27, 1
        %s266 = scalar_select %p265, %s27, 1
        %p267 = scmp.lt.s32.totalorder %s28, 1
        %s268 = scalar_select %p267, %s28, 1
        %s269 = smul.addr %s266, 2
        %s270 = sadd.s32 %s268, %s269
        %s271 = smul.addr %s270, 8
        %s272 = scalar_lea.vmem %s0, %s271
        %p273 = pneg %p64
        %p274 = pneg %p61
        %s275 = sand.u32 %s81, 1
        %s276 = scalar_lea.sflag [#allocation3], %s275
        %s277 = sand.u32 %s81, 1
        %s278 = smul.addr %s277, 32
        %s279 = scalar_lea.vmem [#allocation2], %s278
        %p280 = pneg %p94
        %p281 = pneg %p91
        %p282 = pneg %p115
        %p283 = pneg %p112
        %p284 = pneg %p136
        %p285 = pneg %p133
        %p286 = pneg %p157
        %p287 = pneg %p154
        %p288 = pneg %p185
        %p289 = pneg %p182
        %s290 = sand.u32 %s172, 1
        %s291 = scalar_lea.sflag [#allocation4], %s290
        %s292 = sand.u32 %s172, 1
        %s293 = smul.addr %s292, 16
        %s294 = scalar_lea.vmem [#allocation5], %s293
        %p295 = scmp.lt.s32.totalorder %s27, 1
        %s296 = scalar_select %p295, %s27, 1
        %p297 = scmp.lt.s32.totalorder %s28, 1
        %s298 = scalar_select %p297, %s28, 1
        %s299 = smul.addr %s296, 2
        %s300 = sadd.s32 %s298, %s299
        %s301 = smul.addr %s300, 8
        %s302 = scalar_lea.vmem %s0, %s301
        %s303 = smul.u32 4, %s29
        %v304 = vld [vmem:[%s3] sm:$0xff]
        %v305 = vld [vmem:[%s3 + $0x8] sm:$0xff]
        %v306 = vld [vmem:[%s260] sm:$0xff]
        %vm307 = vcmask 64512
        %v309 = vsel %vm307, %v304, 0
        %v312 = vsel %vm307, %v305, 0
        %314 = vmatprep.subr.mxu0 0.0
        %315 = vmatpush1.msra.mxu0 %v306
        %316 = vmatprep.subr.mxu0 0.0
        %317 = vmatpush1.msra.mxu0 0.0
        %318 = vmatprep.subr.mxu0 0.0
        %319 = vmatpush1.msra.mxu0 0.0
        %320 = vmatprep.subr.mxu0 0.0
        %321 = vmatpush1.msra.mxu0 0.0
        %322 = vmatprep.subr.mxu0 0.0
        %323 = vmatpush1.msra.mxu0 0.0
        %324 = vmatprep.subr.mxu0 0.0
        %325 = vmatpush1.msra.mxu0 0.0
        %326 = vmatprep.subr.mxu0 0.0
        %327 = vmatpush1.msra.mxu0 0.0
        %328 = vmatprep.subr.mxu0 0.0
        %329 = vmatpush1.msra.mxu0 0.0
        %330 = vmatprep.subr.mxu0 0.0
        %331 = vmatpush1.msra.mxu0 0.0
        %332 = vmatprep.subr.mxu0 0.0
        %333 = vmatpush1.msra.mxu0 0.0
        %334 = vmatprep.subr.mxu0 0.0
        %335 = vmatpush1.msra.mxu0 0.0
        %336 = vmatprep.subr.mxu0 0.0
        %337 = vmatpush1.msra.mxu0 0.0
        %338 = vmatprep.subr.mxu0 0.0
        %339 = vmatpush1.msra.mxu0 0.0
        %340 = vmatprep.subr.mxu0 0.0
        %341 = vmatpush1.msra.mxu0 0.0
        %342 = vmatprep.subr.mxu0 0.0
        %343 = vmatpush1.msra.mxu0 0.0
        %344 = vmatprep.subr.mxu0 0.0
        %345 = vmatpush1.msra.mxu0 0.0
        %346 = vmatprep.subr.mxu0 0.0
        %347 = vmatpush1.msra.mxu0 0.0
        %348 = vmatprep.subr.mxu0 0.0
        %349 = vmatpush1.msra.mxu0 0.0
        %350 = vmatprep.subr.mxu0 0.0
        %351 = vmatpush1.msra.mxu0 0.0
        %352 = vmatprep.subr.mxu0 0.0
        %353 = vmatpush1.msra.mxu0 0.0
        %354 = vmatprep.subr.mxu0 0.0
        %355 = vmatpush1.msra.mxu0 0.0
        %356 = vmatprep.subr.mxu0 0.0
        %357 = vmatpush1.msra.mxu0 0.0
        %358 = vmatprep.subr.mxu0 0.0
        %359 = vmatpush1.msra.mxu0 0.0
        %360 = vmatprep.subr.mxu0 0.0
        %361 = vmatpush1.msra.mxu0 0.0
        %362 = vmatprep.subr.mxu0 0.0
        %363 = vmatpush1.msra.mxu0 0.0
        %364 = vmatprep.subr.mxu0 0.0
        %365 = vmatpush1.msra.mxu0 0.0
        %366 = vmatprep.subr.mxu0 0.0
        %367 = vmatpush1.msra.mxu0 0.0
        %368 = vmatprep.subr.mxu0 0.0
        %369 = vmatpush1.msra.mxu0 0.0
        %370 = vmatprep.subr.mxu0 0.0
        %371 = vmatpush1.msra.mxu0 0.0
        %372 = vmatprep.subr.mxu0 0.0
        %373 = vmatpush1.msra.mxu0 0.0
        %374 = vmatprep.subr.mxu0 0.0
        %375 = vmatpush1.msra.mxu0 0.0
        %376 = vmatprep.subr.mxu0 0.0
        %377 = vmatpush1.msra.mxu0 0.0
        %378 = vmatprep.mubr.f32.mxu0 0.0
        %379 = vmatmul.mubr.f32.gmra.mrb[0].mxu0 %v309
        %v380 = vpop.f32.mrb[0].mxu0
        %v381 = vadd.f32 0.0, %v380
        %v382 = vpop.f32.mrb[0].mxu0
        %383 = vmatprep.mubr.f32.mxu0 0.0
        %384 = vmatmul.mubr.f32.gmra.mrb[0].mxu0 %v312
        %v385 = vpop.f32.mrb[0].mxu0
        %v386 = vadd.f32 0.0, %v385
        %v387 = vpop.f32.mrb[0].mxu0
        %388 = vdwg.mxu0
        %s389 = scalar_lea.vmem %s260, 8 [#allocation2]
        %v390 = vld [vmem:[%s389] sm:$0xff]
        %391 = vmatprep.subr.mxu0 0.0
        %392 = vmatpush1.msra.mxu0 %v390
        %393 = vmatprep.subr.mxu0 0.0
        %394 = vmatpush1.msra.mxu0 0.0
        %395 = vmatprep.subr.mxu0 0.0
        %396 = vmatpush1.msra.mxu0 0.0
        %397 = vmatprep.subr.mxu0 0.0
        %398 = vmatpush1.msra.mxu0 0.0
        %399 = vmatprep.subr.mxu0 0.0
        %400 = vmatpush1.msra.mxu0 0.0
        %401 = vmatprep.subr.mxu0 0.0
        %402 = vmatpush1.msra.mxu0 0.0
        %403 = vmatprep.subr.mxu0 0.0
        %404 = vmatpush1.msra.mxu0 0.0
        %405 = vmatprep.subr.mxu0 0.0
        %406 = vmatpush1.msra.mxu0 0.0
        %407 = vmatprep.subr.mxu0 0.0
        %408 = vmatpush1.msra.mxu0 0.0
        %409 = vmatprep.subr.mxu0 0.0
        %410 = vmatpush1.msra.mxu0 0.0
        %411 = vmatprep.subr.mxu0 0.0
        %412 = vmatpush1.msra.mxu0 0.0
        %413 = vmatprep.subr.mxu0 0.0
        %414 = vmatpush1.msra.mxu0 0.0
        %415 = vmatprep.subr.mxu0 0.0
        %416 = vmatpush1.msra.mxu0 0.0
        %417 = vmatprep.subr.mxu0 0.0
        %418 = vmatpush1.msra.mxu0 0.0
        %419 = vmatprep.subr.mxu0 0.0
        %420 = vmatpush1.msra.mxu0 0.0
        %421 = vmatprep.subr.mxu0 0.0
        %422 = vmatpush1.msra.mxu0 0.0
        %423 = vmatprep.subr.mxu0 0.0
        %424 = vmatpush1.msra.mxu0 0.0
        %425 = vmatprep.subr.mxu0 0.0
        %426 = vmatpush1.msra.mxu0 0.0
        %427 = vmatprep.subr.mxu0 0.0
        %428 = vmatpush1.msra.mxu0 0.0
        %429 = vmatprep.subr.mxu0 0.0
        %430 = vmatpush1.msra.mxu0 0.0
        %431 = vmatprep.subr.mxu0 0.0
        %432 = vmatpush1.msra.mxu0 0.0
        %433 = vmatprep.subr.mxu0 0.0
        %434 = vmatpush1.msra.mxu0 0.0
        %435 = vmatprep.subr.mxu0 0.0
        %436 = vmatpush1.msra.mxu0 0.0
        %437 = vmatprep.subr.mxu0 0.0
        %438 = vmatpush1.msra.mxu0 0.0
        %439 = vmatprep.subr.mxu0 0.0
        %440 = vmatpush1.msra.mxu0 0.0
        %441 = vmatprep.subr.mxu0 0.0
        %442 = vmatpush1.msra.mxu0 0.0
        %443 = vmatprep.subr.mxu0 0.0
        %444 = vmatpush1.msra.mxu0 0.0
        %445 = vmatprep.subr.mxu0 0.0
        %446 = vmatpush1.msra.mxu0 0.0
        %447 = vmatprep.subr.mxu0 0.0
        %448 = vmatpush1.msra.mxu0 0.0
        %449 = vmatprep.subr.mxu0 0.0
        %450 = vmatpush1.msra.mxu0 0.0
        %451 = vmatprep.subr.mxu0 0.0
        %452 = vmatpush1.msra.mxu0 0.0
        %453 = vmatprep.subr.mxu0 0.0
        %454 = vmatpush1.msra.mxu0 0.0
        %455 = vmatprep.mubr.f32.mxu0 0.0
        %456 = vmatmul.mubr.f32.gmra.mrb[0].mxu0 %v309
        %v457 = vpop.f32.mrb[0].mxu0
        %v458 = vadd.f32 0.0, %v457
        %v459 = vpop.f32.mrb[0].mxu0
        %460 = vmatprep.mubr.f32.mxu0 0.0
        %461 = vmatmul.mubr.f32.gmra.mrb[0].mxu0 %v312
        %v462 = vpop.f32.mrb[0].mxu0
        %v463 = vadd.f32 0.0, %v462
        %v464 = vpop.f32.mrb[0].mxu0
        %465 = vdwg.mxu0
        %v466 = vmax.f32 %v381, %v458
        %v467 = vmax.f32 %v386, %v463
        %s468 = scalar_lea.vmem %s260, 16 [#allocation2]
        %v469 = vld [vmem:[%s468] sm:$0xff]
        %470 = vmatprep.subr.mxu0 0.0
        %471 = vmatpush1.msra.mxu0 %v469
        %472 = vmatprep.subr.mxu0 0.0
        %473 = vmatpush1.msra.mxu0 0.0
        %474 = vmatprep.subr.mxu0 0.0
        %475 = vmatpush1.msra.mxu0 0.0
        %476 = vmatprep.subr.mxu0 0.0
        %477 = vmatpush1.msra.mxu0 0.0
        %478 = vmatprep.subr.mxu0 0.0
        %479 = vmatpush1.msra.mxu0 0.0
        %480 = vmatprep.subr.mxu0 0.0
        %481 = vmatpush1.msra.mxu0 0.0
        %482 = vmatprep.subr.mxu0 0.0
        %483 = vmatpush1.msra.mxu0 0.0
        %484 = vmatprep.subr.mxu0 0.0
        %485 = vmatpush1.msra.mxu0 0.0
        %486 = vmatprep.subr.mxu0 0.0
        %487 = vmatpush1.msra.mxu0 0.0
        %488 = vmatprep.subr.mxu0 0.0
        %489 = vmatpush1.msra.mxu0 0.0
        %490 = vmatprep.subr.mxu0 0.0
        %491 = vmatpush1.msra.mxu0 0.0
        %492 = vmatprep.subr.mxu0 0.0
        %493 = vmatpush1.msra.mxu0 0.0
        %494 = vmatprep.subr.mxu0 0.0
        %495 = vmatpush1.msra.mxu0 0.0
        %496 = vmatprep.subr.mxu0 0.0
        %497 = vmatpush1.msra.mxu0 0.0
        %498 = vmatprep.subr.mxu0 0.0
        %499 = vmatpush1.msra.mxu0 0.0
        %500 = vmatprep.subr.mxu0 0.0
        %501 = vmatpush1.msra.mxu0 0.0
        %502 = vmatprep.subr.mxu0 0.0
        %503 = vmatpush1.msra.mxu0 0.0
        %504 = vmatprep.subr.mxu0 0.0
        %505 = vmatpush1.msra.mxu0 0.0
        %506 = vmatprep.subr.mxu0 0.0
        %507 = vmatpush1.msra.mxu0 0.0
        %508 = vmatprep.subr.mxu0 0.0
        %509 = vmatpush1.msra.mxu0 0.0
        %510 = vmatprep.subr.mxu0 0.0
        %511 = vmatpush1.msra.mxu0 0.0
        %512 = vmatprep.subr.mxu0 0.0
        %513 = vmatpush1.msra.mxu0 0.0
        %514 = vmatprep.subr.mxu0 0.0
        %515 = vmatpush1.msra.mxu0 0.0
        %516 = vmatprep.subr.mxu0 0.0
        %517 = vmatpush1.msra.mxu0 0.0
        %518 = vmatprep.subr.mxu0 0.0
        %519 = vmatpush1.msra.mxu0 0.0
        %520 = vmatprep.subr.mxu0 0.0
        %521 = vmatpush1.msra.mxu0 0.0
        %522 = vmatprep.subr.mxu0 0.0
        %523 = vmatpush1.msra.mxu0 0.0
        %524 = vmatprep.subr.mxu0 0.0
        %525 = vmatpush1.msra.mxu0 0.0
        %526 = vmatprep.subr.mxu0 0.0
        %527 = vmatpush1.msra.mxu0 0.0
        %528 = vmatprep.subr.mxu0 0.0
        %529 = vmatpush1.msra.mxu0 0.0
        %530 = vmatprep.subr.mxu0 0.0
        %531 = vmatpush1.msra.mxu0 0.0
        %532 = vmatprep.subr.mxu0 0.0
        %533 = vmatpush1.msra.mxu0 0.0
        %534 = vmatprep.mubr.f32.mxu0 0.0
        %535 = vmatmul.mubr.f32.gmra.mrb[0].mxu0 %v309
        %v536 = vpop.f32.mrb[0].mxu0
        %v537 = vadd.f32 0.0, %v536
        %v538 = vpop.f32.mrb[0].mxu0
        %539 = vmatprep.mubr.f32.mxu0 0.0
        %540 = vmatmul.mubr.f32.gmra.mrb[0].mxu0 %v312
        %v541 = vpop.f32.mrb[0].mxu0
        %v542 = vadd.f32 0.0, %v541
        %v543 = vpop.f32.mrb[0].mxu0
        %544 = vdwg.mxu0
        %v545 = vmax.f32 %v466, %v537
        %v546 = vmax.f32 %v467, %v542
        %s547 = scalar_lea.vmem %s260, 24 [#allocation2]
        %v548 = vld [vmem:[%s547] sm:$0xff]
        %549 = vmatprep.subr.mxu0 0.0
        %550 = vmatpush1.msra.mxu0 %v548
        %551 = vmatprep.subr.mxu0 0.0
        %552 = vmatpush1.msra.mxu0 0.0
        %553 = vmatprep.subr.mxu0 0.0
        %554 = vmatpush1.msra.mxu0 0.0
        %555 = vmatprep.subr.mxu0 0.0
        %556 = vmatpush1.msra.mxu0 0.0
        %557 = vmatprep.subr.mxu0 0.0
        %558 = vmatpush1.msra.mxu0 0.0
        %559 = vmatprep.subr.mxu0 0.0
        %560 = vmatpush1.msra.mxu0 0.0
        %561 = vmatprep.subr.mxu0 0.0
        %562 = vmatpush1.msra.mxu0 0.0
        %563 = vmatprep.subr.mxu0 0.0
        %564 = vmatpush1.msra.mxu0 0.0
        %565 = vmatprep.subr.mxu0 0.0
        %566 = vmatpush1.msra.mxu0 0.0
        %567 = vmatprep.subr.mxu0 0.0
        %568 = vmatpush1.msra.mxu0 0.0
        %569 = vmatprep.subr.mxu0 0.0
        %570 = vmatpush1.msra.mxu0 0.0
        %571 = vmatprep.subr.mxu0 0.0
        %572 = vmatpush1.msra.mxu0 0.0
        %573 = vmatprep.subr.mxu0 0.0
        %574 = vmatpush1.msra.mxu0 0.0
        %575 = vmatprep.subr.mxu0 0.0
        %576 = vmatpush1.msra.mxu0 0.0
        %577 = vmatprep.subr.mxu0 0.0
        %578 = vmatpush1.msra.mxu0 0.0
        %579 = vmatprep.subr.mxu0 0.0
        %580 = vmatpush1.msra.mxu0 0.0
        %581 = vmatprep.subr.mxu0 0.0
        %582 = vmatpush1.msra.mxu0 0.0
        %583 = vmatprep.subr.mxu0 0.0
        %584 = vmatpush1.msra.mxu0 0.0
        %585 = vmatprep.subr.mxu0 0.0
        %586 = vmatpush1.msra.mxu0 0.0
        %587 = vmatprep.subr.mxu0 0.0
        %588 = vmatpush1.msra.mxu0 0.0
        %589 = vmatprep.subr.mxu0 0.0
        %590 = vmatpush1.msra.mxu0 0.0
        %591 = vmatprep.subr.mxu0 0.0
        %592 = vmatpush1.msra.mxu0 0.0
        %593 = vmatprep.subr.mxu0 0.0
        %594 = vmatpush1.msra.mxu0 0.0
        %595 = vmatprep.subr.mxu0 0.0
        %596 = vmatpush1.msra.mxu0 0.0
        %597 = vmatprep.subr.mxu0 0.0
        %598 = vmatpush1.msra.mxu0 0.0
        %599 = vmatprep.subr.mxu0 0.0
        %600 = vmatpush1.msra.mxu0 0.0
        %601 = vmatprep.subr.mxu0 0.0
        %602 = vmatpush1.msra.mxu0 0.0
        %603 = vmatprep.subr.mxu0 0.0
        %604 = vmatpush1.msra.mxu0 0.0
        %605 = vmatprep.subr.mxu0 0.0
        %606 = vmatpush1.msra.mxu0 0.0
        %607 = vmatprep.subr.mxu0 0.0
        %608 = vmatpush1.msra.mxu0 0.0
        %609 = vmatprep.subr.mxu0 0.0
        %610 = vmatpush1.msra.mxu0 0.0
        %611 = vmatprep.subr.mxu0 0.0
        %612 = vmatpush1.msra.mxu0 0.0
        %613 = vmatprep.mubr.f32.mxu0 0.0
        %614 = vmatmul.mubr.f32.gmra.mrb[0].mxu0 %v309
        %v615 = vpop.f32.mrb[0].mxu0
        %v616 = vadd.f32 0.0, %v615
        %v617 = vpop.f32.mrb[0].mxu0
        %618 = vmatprep.mubr.f32.mxu0 0.0
        %619 = vmatmul.mubr.f32.gmra.mrb[0].mxu0 %v312
        %v620 = vpop.f32.mrb[0].mxu0
        %v621 = vadd.f32 0.0, %v620
        %v622 = vpop.f32.mrb[0].mxu0
        %623 = vdwg.mxu0
        %v624 = vmax.f32 %v545, %v616
        %v625 = vmax.f32 %v546, %v621
        %p626 = scmp.eq.s32.totalorder %s29, 0
        // Predicated region
        $region45: #{tpu_custom_call.1} parent=39 // pred_check
          %p627 = pneg %p626
        $region46: #{tpu_custom_call.1} parent=39 // pred_check_branch
          %629 = sbr.rel (%p627) target = $region48
        $region47: #{tpu_custom_call.1} parent=39 // pred_region
          %630 = vst [vmem:[%s294] sm:$0xff] %v624
          %631 = vst [vmem:[%s294 + $0x8] sm:$0xff] %v625
        $region48: #{tpu_custom_call.1} parent=39 // pred_fallthru
          _
        %p632 = scmp.gt.s32.totalorder %s29, 0
        // Predicated region
        $region49: #{tpu_custom_call.1} parent=39 // pred_check
          %p633 = pneg %p632
        $region50: #{tpu_custom_call.1} parent=39 // pred_check_branch
          %635 = sbr.rel (%p633) target = $region52
        $region51: #{tpu_custom_call.1} parent=39 // pred_region
          %v636 = vld [vmem:[%s294] sm:$0xff]
          %v637 = vld [vmem:[%s294 + $0x8] sm:$0xff]
          %v638 = vmax.f32 %v636, %v624
          %v639 = vmax.f32 %v637, %v625
          %640 = vst [vmem:[%s294] sm:$0xff] %v638
          %641 = vst [vmem:[%s294 + $0x8] sm:$0xff] %v639
        $region52: #{tpu_custom_call.1} parent=39 // pred_fallthru
          _
        %p642 = scmp.eq.s32.totalorder %s29, 1
        // Predicated region
        $region53: #{tpu_custom_call.1} parent=39 // pred_check
          %p643 = pneg %p642
        $region54: #{tpu_custom_call.1} parent=39 // pred_check_branch
          %645 = sbr.rel (%p643) target = $region56
        $region55: #{tpu_custom_call.1} parent=39 // pred_region
          %v646 = vld [vmem:[%s2] sm:$0xff]
          %v647 = vld [vmem:[%s2 + $0x8] sm:$0xff]
          %v648 = vld [vmem:[%s302] sm:$0xff]
          %v650 = vsel %vm307, %v646, 0
          %v653 = vsel %vm307, %v647, 0
          %655 = vmatprep.subr.mxu0 0.0
          %656 = vmatpush1.msra.mxu0 %v648
          %657 = vmatprep.subr.mxu0 0.0
          %658 = vmatpush1.msra.mxu0 0.0
          %659 = vmatprep.subr.mxu0 0.0
          %660 = vmatpush1.msra.mxu0 0.0
          %661 = vmatprep.subr.mxu0 0.0
          %662 = vmatpush1.msra.mxu0 0.0
          %663 = vmatprep.subr.mxu0 0.0
          %664 = vmatpush1.msra.mxu0 0.0
          %665 = vmatprep.subr.mxu0 0.0
          %666 = vmatpush1.msra.mxu0 0.0
          %667 = vmatprep.subr.mxu0 0.0
          %668 = vmatpush1.msra.mxu0 0.0
          %669 = vmatprep.subr.mxu0 0.0
          %670 = vmatpush1.msra.mxu0 0.0
          %671 = vmatprep.subr.mxu0 0.0
          %672 = vmatpush1.msra.mxu0 0.0
          %673 = vmatprep.subr.mxu0 0.0
          %674 = vmatpush1.msra.mxu0 0.0
          %675 = vmatprep.subr.mxu0 0.0
          %676 = vmatpush1.msra.mxu0 0.0
          %677 = vmatprep.subr.mxu0 0.0
          %678 = vmatpush1.msra.mxu0 0.0
          %679 = vmatprep.subr.mxu0 0.0
          %680 = vmatpush1.msra.mxu0 0.0
          %681 = vmatprep.subr.mxu0 0.0
          %682 = vmatpush1.msra.mxu0 0.0
          %683 = vmatprep.subr.mxu0 0.0
          %684 = vmatpush1.msra.mxu0 0.0
          %685 = vmatprep.subr.mxu0 0.0
          %686 = vmatpush1.msra.mxu0 0.0
          %687 = vmatprep.subr.mxu0 0.0
          %688 = vmatpush1.msra.mxu0 0.0
          %689 = vmatprep.subr.mxu0 0.0
          %690 = vmatpush1.msra.mxu0 0.0
          %691 = vmatprep.subr.mxu0 0.0
          %692 = vmatpush1.msra.mxu0 0.0
          %693 = vmatprep.subr.mxu0 0.0
          %694 = vmatpush1.msra.mxu0 0.0
          %695 = vmatprep.subr.mxu0 0.0
          %696 = vmatpush1.msra.mxu0 0.0
          %697 = vmatprep.subr.mxu0 0.0
          %698 = vmatpush1.msra.mxu0 0.0
          %699 = vmatprep.subr.mxu0 0.0
          %700 = vmatpush1.msra.mxu0 0.0
          %701 = vmatprep.subr.mxu0 0.0
          %702 = vmatpush1.msra.mxu0 0.0
          %703 = vmatprep.subr.mxu0 0.0
          %704 = vmatpush1.msra.mxu0 0.0
          %705 = vmatprep.subr.mxu0 0.0
          %706 = vmatpush1.msra.mxu0 0.0
          %707 = vmatprep.subr.mxu0 0.0
          %708 = vmatpush1.msra.mxu0 0.0
          %709 = vmatprep.subr.mxu0 0.0
          %710 = vmatpush1.msra.mxu0 0.0
          %711 = vmatprep.subr.mxu0 0.0
          %712 = vmatpush1.msra.mxu0 0.0
          %713 = vmatprep.subr.mxu0 0.0
          %714 = vmatpush1.msra.mxu0 0.0
          %715 = vmatprep.subr.mxu0 0.0
          %716 = vmatpush1.msra.mxu0 0.0
          %717 = vmatprep.subr.mxu0 0.0
          %718 = vmatpush1.msra.mxu0 0.0
          %719 = vmatprep.mubr.f32.mxu0 0.0
          %720 = vmatmul.mubr.f32.gmra.mrb[0].mxu0 %v650
          %v721 = vpop.f32.mrb[0].mxu0
          %v722 = vadd.f32 0.0, %v721
          %v723 = vpop.f32.mrb[0].mxu0
          %724 = vmatprep.mubr.f32.mxu0 0.0
          %725 = vmatmul.mubr.f32.gmra.mrb[0].mxu0 %v653
          %v726 = vpop.f32.mrb[0].mxu0
          %v727 = vadd.f32 0.0, %v726
          %v728 = vpop.f32.mrb[0].mxu0
          %729 = vdwg.mxu0
          %v730 = vld [vmem:[%s294] sm:$0xff]
          %v731 = vld [vmem:[%s294 + $0x8] sm:$0xff]
          %v732 = vadd.f32 %v730, %v722
          %v733 = vadd.f32 %v731, %v727
          %v734 = vld [vmem:[%s4] sm:$0xff]
          %v735 = vld [vmem:[%s4 + $0x8] sm:$0xff]
          %737 = vset.pattern.permute.xlu0 0
          %738 = vperm.xlu0 %737, %v734
          %v739 = vpop.permute.xlu0 %738
          %742 = vset.pattern.permute.xlu0 0
          %743 = vperm.xlu0 %742, %v735
          %v744 = vpop.permute.xlu0 %743
          %v746 = vadd.f32 %v732, %v739
          %v747 = vadd.f32 %v733, %v744
          %v748 = vmax.f32 %v746, 0.0
          %v749 = vmax.f32 %v747, 0.0
          %750 = vst [vmem:[%s294] sm:$0xff] %v748
          %751 = vst [vmem:[%s294 + $0x8] sm:$0xff] %v749
        $region56: #{tpu_custom_call.1} parent=39 // pred_fallthru
          _
        %s752 = sand.u32 %s172, 1
        %s753 = scalar_lea.sflag [#allocation4], %s752
        %s754 = sand.u32 %s172, 1
        %s755 = smul.addr %s754, 16
        %s756 = scalar_lea.vmem [#allocation5], %s755
        // Predicated region
        $region57: #{tpu_custom_call.1} parent=39 // pred_check
          %p757 = pneg %p182
        $region58: #{tpu_custom_call.1} parent=39 // pred_check_branch
          %759 = sbr.rel (%p757) target = $region60
        $region59: #{tpu_custom_call.1} parent=39 // pred_region
          %s761 = ssub.s32 256, 256
          %762 = vsyncadd %s753, %s761
          %s763 = smul.addr %s27, 4
          %s764 = sadd.s32 %s28, %s763
          %s765 = smul.addr %s764, 128
          %s766 = scalar_lea.hbm %s5, %s765
          %s767 = sshll.u32 %s756, 4
          %s768 = int_to_ptr.vmem [resolvable:$true] %s767
          %773 = dma.vmem_to_hbm [thread:$0]  %s768, 256, %s766, %s753, 128, 256, 8
        $region60: #{tpu_custom_call.1} parent=39 // pred_fallthru
          _
      $region40: #{tpu_custom_call.1} parent=5 // pred_fallthru
        _
      %p774 = scmp.le.s32.totalorder 2, %s17
      // Predicated region
      $region61: #{tpu_custom_call.1} parent=5 // pred_check
        %p775 = pneg %p774
      $region62: #{tpu_custom_call.1} parent=5 // pred_check_branch
        %777 = sbr.rel (%p775) target = $region64
      $region63: #{tpu_custom_call.1} parent=5 // pred_region
        %s778 = ssub.s32 %s17, 2
        // Predicated region
        $region65: #{tpu_custom_call.1} parent=63 // pred_check
          %p779 = pneg %p188
        $region66: #{tpu_custom_call.1} parent=63 // pred_check_branch
          %781 = sbr.rel (%p779) target = $region68
        $region67: #{tpu_custom_call.1} parent=63 // pred_region
          %s782 = sand.u32 %s173, 1
          %s783 = scalar_lea.sflag [#allocation4], %s782
          %s784 = sand.u32 %s173, 1
          %s785 = smul.addr %s784, 16
          %s786 = scalar_lea.vmem [#allocation5], %s785
          %787 = dma.done %s783, 256
        $region68: #{tpu_custom_call.1} parent=63 // pred_fallthru
          _
      $region64: #{tpu_custom_call.1} parent=5 // pred_fallthru
        _
    $region6: #{tpu_custom_call.1} parent=1 // loop_footer
      %s21 = sadd.s32 1, %s17
    $region7: #{tpu_custom_call.1} parent=1 // loop_footer_branch
      %16 = sbr.rel target = $region3
    $region8: #{tpu_custom_call.1} parent=1 // loop_exit
      _
    %788 = vsyncpa [#allocation3], 1
    %s789 = scalar_lea.sflag [#allocation3], 1
    %790 = vsyncpa %s789, 1
    %791 = vsyncpa [#allocation4], 1
    %s792 = scalar_lea.sflag [#allocation4], 1
    %793 = vsyncpa %s792, 1

</llo_original>
